<compile_context>
chip_gen: v6e
topology: v6e:2x2x1
jax: 0.10.0
libtpu: 0.0.40
codegen_flags: <defaults>
</compile_context>

<pallas_src>
import functools

import jax
import jax.numpy as jnp
from jax.experimental import pallas as pl
from jax.experimental.pallas import tpu as pltpu


def _cra_dot_kernel(x_ref, y_ref, out_x_ref, out_y_ref, *, hw_valid, hw_padded):
    """One (rb, hw_padded) tile: mul + two row softmaxes + rescale.

    The x path is fully finished (out_x written) before the y path starts so
    the peak number of live full-tile f32 intermediates stays small.
    """
    x = x_ref[...].astype(jnp.float32)
    y = y_ref[...].astype(jnp.float32)

    need_mask = hw_padded != hw_valid
    if need_mask:
        lane = jax.lax.broadcasted_iota(jnp.int32, x.shape, dimension=1)
        pad_lane = lane >= hw_valid
        neg_inf = jnp.float32(-jnp.inf)

    def _row_softmax(s):
        if need_mask:
            # Padded lanes -> -inf so they contribute exp(-inf) = 0 to the sum.
            s = jnp.where(pad_lane, neg_inf, s)
        m = jnp.max(s, axis=-1, keepdims=True)
        e = jnp.exp(s - m)
        d = jnp.sum(e, axis=-1, keepdims=True)
        # EUP approx reciprocal (free slot) + one Newton step -> ~f32 accuracy.
        inv = pl.reciprocal(d, approx=True)
        inv = inv * (2.0 - d * inv)
        return e * inv

    # --- x path: softmax(x * y, axis=-1) * x --------------------------------
    out_x_ref[...] = (_row_softmax(x * y) * x).astype(out_x_ref.dtype)

    # --- y path: softmax(y*y - x*y) * y == softmax(y*(y-x)) * y -------------
    out_y_ref[...] = (_row_softmax(y * (y - x)) * y).astype(out_y_ref.dtype)


def _choose_row_block(rows, hw_padded, *, target_block_bytes=1 << 20):
    """Multiple-of-8 row block sized so one f32 block is ~1 MiB, keeping the
    grid at >= 2 steps when possible (megacore / v7x dual TensorCore)."""
    if rows <= 8:
        return rows  # full-extent block is allowed by the (8,128) rule
    rb = max(8, (target_block_bytes // (hw_padded * 4)) // 8 * 8)
    half_rb = (((rows + 1) // 2) + 7) // 8 * 8
    rb = min(rb, half_rb)                  # keep at least 2 grid steps
    rb = min(rb, ((rows + 7) // 8) * 8)    # don't exceed the row count
    return rb


def cra_dot(x, y):
    """x, y: (b, c, h, w) arrays. Returns (out_x, out_y) with the same shape."""
    assert x.shape == y.shape
    b, c, h, w = x.shape
    rows, hw = b * c, h * w

    # Lane-dense layout: pad h*w up to a multiple of 128 (masked in-kernel).
    hw_padded = max(128, ((hw + 127) // 128) * 128)

    x2 = x.reshape(rows, hw)
    y2 = y.reshape(rows, hw)
    if hw_padded != hw:
        pad = ((0, 0), (0, hw_padded - hw))
        x2 = jnp.pad(x2, pad)
        y2 = jnp.pad(y2, pad)

    rb = _choose_row_block(rows, hw_padded)
    grid = (pl.cdiv(rows, rb),)  # ragged last tile handled by Pallas masking

    spec = pl.BlockSpec((rb, hw_padded), lambda i: (i, 0))

    # VMEM budget: double-buffered I/O (2 in + 2 out) + ~8 f32 intermediates,
    # clamped to [32 MiB, 48 MiB] so it is safe on v5e/v6e and v7x (64 MiB).
    itemsize = max(jnp.dtype(x.dtype).itemsize, jnp.dtype(y.dtype).itemsize)
    io_bytes = 2 * 4 * rb * hw_padded * itemsize
    interm_bytes = 8 * rb * hw_padded * 4
    vmem_limit = int(min(max(io_bytes + interm_bytes + (4 << 20), 32 << 20), 48 << 20))

    kernel = functools.partial(_cra_dot_kernel, hw_valid=hw, hw_padded=hw_padded)

    out_x2, out_y2 = pl.pallas_call(
        kernel,
        grid_spec=pltpu.PrefetchScalarGridSpec(
            num_scalar_prefetch=0,
            grid=grid,
            in_specs=[spec, spec],
            out_specs=[spec, spec],
        ),
        out_shape=(
            jax.ShapeDtypeStruct((rows, hw_padded), x.dtype),
            jax.ShapeDtypeStruct((rows, hw_padded), y.dtype),
        ),
        compiler_params=pltpu.CompilerParams(
            dimension_semantics=("parallel",),
            vmem_limit_bytes=vmem_limit,
        ),
    )(x2, y2)

    if hw_padded != hw:
        out_x2 = out_x2[:, :hw]
        out_y2 = out_y2[:, :hw]
    return out_x2.reshape(b, c, h, w), out_y2.reshape(b, c, h, w)


def _reference(x, y):
    b, c, h, w = x.shape
    xy = (x * y).reshape(b, c, h * w)
    x_scale = jax.nn.softmax(xy, axis=-1).reshape(b, c, h, w)
    yy = (y * y).reshape(b, c, h * w) - xy
    y_scale = jax.nn.softmax(yy, axis=-1).reshape(b, c, h, w)
    return x_scale * x, y_scale * y


if __name__ == "__main__":
    key = jax.random.PRNGKey(0)
    kx, ky = jax.random.split(key)
    b, c, h, w = 2, 4, 16, 16
    x = jax.random.normal(kx, (b, c, h, w), dtype=jnp.float32)
    y = jax.random.normal(ky, (b, c, h, w), dtype=jnp.float32)

    out_x, out_y = cra_dot(x, y)
    jax.block_until_ready((out_x, out_y))

    ref_x, ref_y = _reference(x, y)
    assert jnp.allclose(out_x, ref_x, atol=1e-5, rtol=1e-5)
    assert jnp.allclose(out_y, ref_y, atol=1e-5, rtol=1e-5)

    print("KERNEL_OK")
</pallas_src>

<mosaic_0001>
module attributes {stable_mosaic.version = 11 : i64} {
  func.func @_cra_dot_kernel(%arg0: i32, %arg1: memref<8x256xf32, #tpu.memory_space<vmem>>, %arg2: memref<8x256xf32, #tpu.memory_space<vmem>>, %arg3: memref<8x256xf32, #tpu.memory_space<vmem>>, %arg4: memref<8x256xf32, #tpu.memory_space<vmem>>) attributes {dimension_semantics = [#tpu.dimension_semantics<parallel>], iteration_bounds = array<i64: 1>, scalar_prefetch = 0 : i64, scratch_operands = 0 : i64, tpu.core_type = #tpu.core_type<tc>, window_params = [{transform_indices = @transform_0, window_bounds = array<i64: 8, 256>}, {transform_indices = @transform_1, window_bounds = array<i64: 8, 256>}, {transform_indices = @transform_2, window_bounds = array<i64: 8, 256>}, {transform_indices = @transform_3, window_bounds = array<i64: 8, 256>}]} {
    %c0 = arith.constant 0 : index
    %c0_0 = arith.constant 0 : index
    %0 = vector.load %arg1[%c0, %c0_0] : memref<8x256xf32, #tpu.memory_space<vmem>>, vector<8x256xf32>
    %c0_1 = arith.constant 0 : index
    %c0_2 = arith.constant 0 : index
    %1 = vector.load %arg2[%c0_1, %c0_2] : memref<8x256xf32, #tpu.memory_space<vmem>>, vector<8x256xf32>
    %2 = arith.mulf %0, %1 : vector<8x256xf32>
    %cst = arith.constant dense<0xFF800000> : vector<8xf32>
    %3 = vector.multi_reduction <maximumf>, %2, %cst [1] : vector<8x256xf32> to vector<8xf32>
    %4 = vector.shape_cast %3 : vector<8xf32> to vector<8x1xf32>
    %5 = vector.broadcast %4 : vector<8x1xf32> to vector<8x256xf32>
    %6 = arith.subf %2, %5 : vector<8x256xf32>
    %7 = math.exp %6 : vector<8x256xf32>
    %cst_3 = arith.constant dense<0.000000e+00> : vector<8xf32>
    %8 = vector.multi_reduction <add>, %7, %cst_3 [1] : vector<8x256xf32> to vector<8xf32>
    %9 = vector.shape_cast %8 : vector<8xf32> to vector<8x1xf32>
    %10 = tpu.reciprocal %9 {approx = true} : vector<8x1xf32> -> vector<8x1xf32>
    %11 = arith.mulf %9, %10 : vector<8x1xf32>
    %cst_4 = arith.constant 2.000000e+00 : f32
    %12 = vector.broadcast %cst_4 : f32 to vector<8x1xf32>
    %13 = arith.subf %12, %11 : vector<8x1xf32>
    %14 = arith.mulf %10, %13 : vector<8x1xf32>
    %15 = vector.broadcast %14 : vector<8x1xf32> to vector<8x256xf32>
    %16 = arith.mulf %7, %15 : vector<8x256xf32>
    %17 = arith.mulf %16, %0 : vector<8x256xf32>
    %c0_5 = arith.constant 0 : index
    %c0_6 = arith.constant 0 : index
    %18 = vector.load %arg3[%c0_5, %c0_6] : memref<8x256xf32, #tpu.memory_space<vmem>>, vector<8x256xf32>
    tpu.vector_store %arg3[%c0_5, %c0_6], %17 {strides = array<i32>} : memref<8x256xf32, #tpu.memory_space<vmem>>, vector<8x256xf32>,
    %19 = arith.subf %1, %0 : vector<8x256xf32>
    %20 = arith.mulf %1, %19 : vector<8x256xf32>
    %cst_7 = arith.constant dense<0xFF800000> : vector<8xf32>
    %21 = vector.multi_reduction <maximumf>, %20, %cst_7 [1] : vector<8x256xf32> to vector<8xf32>
    %22 = vector.shape_cast %21 : vector<8xf32> to vector<8x1xf32>
    %23 = vector.broadcast %22 : vector<8x1xf32> to vector<8x256xf32>
    %24 = arith.subf %20, %23 : vector<8x256xf32>
    %25 = math.exp %24 : vector<8x256xf32>
    %cst_8 = arith.constant dense<0.000000e+00> : vector<8xf32>
    %26 = vector.multi_reduction <add>, %25, %cst_8 [1] : vector<8x256xf32> to vector<8xf32>
    %27 = vector.shape_cast %26 : vector<8xf32> to vector<8x1xf32>
    %28 = tpu.reciprocal %27 {approx = true} : vector<8x1xf32> -> vector<8x1xf32>
    %29 = arith.mulf %27, %28 : vector<8x1xf32>
    %cst_9 = arith.constant 2.000000e+00 : f32
    %30 = vector.broadcast %cst_9 : f32 to vector<8x1xf32>
    %31 = arith.subf %30, %29 : vector<8x1xf32>
    %32 = arith.mulf %28, %31 : vector<8x1xf32>
    %33 = vector.broadcast %32 : vector<8x1xf32> to vector<8x256xf32>
    %34 = arith.mulf %25, %33 : vector<8x256xf32>
    %35 = arith.mulf %34, %1 : vector<8x256xf32>
    %c0_10 = arith.constant 0 : index
    %c0_11 = arith.constant 0 : index
    %36 = vector.load %arg4[%c0_10, %c0_11] : memref<8x256xf32, #tpu.memory_space<vmem>>, vector<8x256xf32>
    tpu.vector_store %arg4[%c0_10, %c0_11], %35 {strides = array<i32>} : memref<8x256xf32, #tpu.memory_space<vmem>>, vector<8x256xf32>,
    return
  }
  func.func @transform_0(%arg0: i32) -> (i32, i32) {
    %c0_i32 = arith.constant 0 : i32
    %c0_i32_0 = arith.constant 0 : i32
    return %arg0, %c0_i32 : i32, i32
  }
  func.func @transform_1(%arg0: i32) -> (i32, i32) {
    %c0_i32 = arith.constant 0 : i32
    %c0_i32_0 = arith.constant 0 : i32
    return %arg0, %c0_i32 : i32, i32
  }
  func.func @transform_2(%arg0: i32) -> (i32, i32) {
    %c0_i32 = arith.constant 0 : i32
    %c0_i32_0 = arith.constant 0 : i32
    return %arg0, %c0_i32 : i32, i32
  }
  func.func @transform_3(%arg0: i32) -> (i32, i32) {
    %c0_i32 = arith.constant 0 : i32
    %c0_i32_0 = arith.constant 0 : i32
    return %arg0, %c0_i32 : i32, i32
  }
}

</mosaic_0001>

<llo_original>
// kernel: tpu_custom_call.1
$region0: #{tpu_custom_call.1}
  #allocation0 [shape = 'u32[]', space=smem, size = 0x4, offset = 0x4, fixed_abs, tag = 'smem constant byte address 0x4 - core index']
  #allocation1 [shape = 'u32[144,128]{1,0:T(1,128)}', space=vmem, size = 0x12000, scoped, tag = 'internal scratch']
  %s0 = inlined_call_operand.hbm [shape: f32[8,256], index: 0, kind: input, shape index: {}]
  %s1 = inlined_call_operand.hbm [shape: f32[8,256], index: 1, kind: input, shape index: {}]
  %s2 = inlined_call_operand.hbm [shape: f32[8,256], index: 2, kind: output, shape index: {0}]
  %s3 = inlined_call_operand.hbm [shape: f32[8,256], index: 3, kind: output, shape index: {1}]
  %4 = xla_tuple %s2, %s3
  %s5 = sld [smem:[#allocation0]]
  $region34: #{tpu_custom_call.1} parent=0
    _
  %s7 = ssub.s32 1, %s5
  %s8 = scalar_select 0, %s7, %s5
  $region1: #{tpu_custom_call.1} parent=0
    #allocation2 [shape = 'u8[8192]{0}', space=vmem, size = 0x2000, scoped, tag = 'input window, operand 0, single buffered']
    #allocation3 [shape = 's32[1]{0}', space=sflag, size = 0x4, scoped, tag = 'scoped memory for tpu_custom_call.1']
    #allocation4 [shape = 's32[1]{0}', space=sflag, size = 0x4, scoped, tag = 'scoped memory for tpu_custom_call.1']
    #allocation5 [shape = 'u8[8192]{0}', space=vmem, size = 0x2000, scoped, tag = 'input window, operand 1, single buffered']
    #allocation6 [shape = 's32[1]{0}', space=sflag, size = 0x4, scoped, tag = 'scoped memory for tpu_custom_call.1']
    #allocation7 [shape = 'u8[8192]{0}', space=vmem, size = 0x2000, scoped, tag = 'output window, operand 0, single buffered']
    #allocation8 [shape = 'u8[8192]{0}', space=vmem, size = 0x2000, scoped, tag = 'output window, operand 1, single buffered']
    #allocation9 [shape = 's32[1]{0}', space=sflag, size = 0x4, scoped, tag = 'scoped memory for tpu_custom_call.1']
    %9 = vsyncpa [#allocation3], 0
    %10 = vsyncpa [#allocation6], 0
    %11 = vsyncpa [#allocation4], 0
    %12 = vsyncpa [#allocation9], 0
    // Predicated region
    $region2: #{tpu_custom_call.1} parent=1 // pred_check
      _
    $region3: #{tpu_custom_call.1} parent=1 // pred_check_branch
      %14 = sbr.rel (0) target = $region5
    $region4: #{tpu_custom_call.1} parent=1 // pred_region
      %s16 = ssub.s32 256, 256
      %17 = vsyncadd [#allocation3], %s16
      %s19 = sshll.u32 [#allocation2], 4
      %s20 = int_to_ptr.vmem [resolvable:$true] %s19
      %22 = dma.hbm_to_vmem [thread:$0]  %s0, 256, %s20, [#allocation3]
    $region5: #{tpu_custom_call.1} parent=1 // pred_fallthru
      _
    // Predicated region
    $region6: #{tpu_custom_call.1} parent=1 // pred_check
      _
    $region7: #{tpu_custom_call.1} parent=1 // pred_check_branch
      %24 = sbr.rel (0) target = $region9
    $region8: #{tpu_custom_call.1} parent=1 // pred_region
      %s26 = ssub.s32 256, 256
      %27 = vsyncadd [#allocation6], %s26
      %s29 = sshll.u32 [#allocation5], 4
      %s30 = int_to_ptr.vmem [resolvable:$true] %s29
      %32 = dma.hbm_to_vmem [thread:$0]  %s1, 256, %s30, [#allocation6]
    $region9: #{tpu_custom_call.1} parent=1 // pred_fallthru
      _
    // Predicated region
    $region10: #{tpu_custom_call.1} parent=1 // pred_check
      _
    $region11: #{tpu_custom_call.1} parent=1 // pred_check_branch
      %34 = sbr.rel (0) target = $region13
    $region12: #{tpu_custom_call.1} parent=1 // pred_region
      %35 = dma.done [#allocation3], 256
    $region13: #{tpu_custom_call.1} parent=1 // pred_fallthru
      _
    // Predicated region
    $region14: #{tpu_custom_call.1} parent=1 // pred_check
      _
    $region15: #{tpu_custom_call.1} parent=1 // pred_check_branch
      %37 = sbr.rel (0) target = $region17
    $region16: #{tpu_custom_call.1} parent=1 // pred_region
      %38 = dma.done [#allocation6], 256
    $region17: #{tpu_custom_call.1} parent=1 // pred_fallthru
      _
    %v39 = vld [vmem:[#allocation2] sm:$0xff]
    %v40 = vld [vmem:[#allocation2 + $0x8] sm:$0xff]
    %v41 = vld [vmem:[#allocation5] sm:$0xff]
    %v42 = vld [vmem:[#allocation5 + $0x8] sm:$0xff]
    %v43 = vmul.f32 %v39, %v41
    %v44 = vmul.f32 %v40, %v42
    %v45 = vmax.f32 %v43, %v44
    %46 = vmax.xlane.f32.xlu0 %v45
    %v47 = vpop.xlane.xlu0 %46
    %v48 = vsub.f32 %v43, %v47
    %v49 = vsub.f32 %v44, %v47
    %v50 = vmul.f32 %v48, 1.442695
    %v51 = vpow.pop %v50
    %v52 = vmul.f32 %v49, 1.442695
    %v53 = vpow.pop %v52
    %v54 = vadd.f32 %v51, %v53
    %55 = vadd.xlane.f32.xlu0 %v54
    %v56 = vpop.xlane.xlu0 %55
    %v57 = vrcp.pop %v56
    %v58 = vmul.f32 %v56, %v57
    %v59 = vsub.f32 2.0, %v58
    %v60 = vmul.f32 %v57, %v59
    %v61 = vmul.f32 %v51, %v60
    %v62 = vmul.f32 %v53, %v60
    %v63 = vmul.f32 %v61, %v39
    %v64 = vmul.f32 %v62, %v40
    %65 = vst [vmem:[#allocation7] sm:$0xff] %v63
    %66 = vst [vmem:[#allocation7 + $0x8] sm:$0xff] %v64
    %v67 = vsub.f32 %v41, %v39
    %v68 = vsub.f32 %v42, %v40
    %v69 = vmul.f32 %v41, %v67
    %v70 = vmul.f32 %v42, %v68
    %v71 = vmax.f32 %v69, %v70
    %72 = vmax.xlane.f32.xlu0 %v71
    %v73 = vpop.xlane.xlu0 %72
    %v74 = vsub.f32 %v69, %v73
    %v75 = vsub.f32 %v70, %v73
    %v76 = vmul.f32 %v74, 1.442695
    %v77 = vpow.pop %v76
    %v78 = vmul.f32 %v75, 1.442695
    %v79 = vpow.pop %v78
    %v80 = vadd.f32 %v77, %v79
    %81 = vadd.xlane.f32.xlu0 %v80
    %v82 = vpop.xlane.xlu0 %81
    %v83 = vrcp.pop %v82
    %v84 = vmul.f32 %v82, %v83
    %v85 = vsub.f32 2.0, %v84
    %v86 = vmul.f32 %v83, %v85
    %v87 = vmul.f32 %v77, %v86
    %v88 = vmul.f32 %v79, %v86
    %v89 = vmul.f32 %v87, %v41
    %v90 = vmul.f32 %v88, %v42
    %91 = vst [vmem:[#allocation8] sm:$0xff] %v89
    %92 = vst [vmem:[#allocation8 + $0x8] sm:$0xff] %v90
    // Predicated region
    $region18: #{tpu_custom_call.1} parent=1 // pred_check
      _
    $region19: #{tpu_custom_call.1} parent=1 // pred_check_branch
      %94 = sbr.rel (0) target = $region21
    $region20: #{tpu_custom_call.1} parent=1 // pred_region
      %s96 = ssub.s32 256, 256
      %97 = vsyncadd [#allocation4], %s96
      %s99 = sshll.u32 [#allocation7], 4
      %s100 = int_to_ptr.vmem [resolvable:$true] %s99
      %102 = dma.vmem_to_hbm [thread:$0]  %s100, 256, %s2, [#allocation4]
    $region21: #{tpu_custom_call.1} parent=1 // pred_fallthru
      _
    // Predicated region
    $region22: #{tpu_custom_call.1} parent=1 // pred_check
      _
    $region23: #{tpu_custom_call.1} parent=1 // pred_check_branch
      %104 = sbr.rel (0) target = $region25
    $region24: #{tpu_custom_call.1} parent=1 // pred_region
      %s106 = ssub.s32 256, 256
      %107 = vsyncadd [#allocation9], %s106
      %s109 = sshll.u32 [#allocation8], 4
      %s110 = int_to_ptr.vmem [resolvable:$true] %s109
      %112 = dma.vmem_to_hbm [thread:$0]  %s110, 256, %s3, [#allocation9]
    $region25: #{tpu_custom_call.1} parent=1 // pred_fallthru
      _
    // Predicated region
    $region26: #{tpu_custom_call.1} parent=1 // pred_check
      _
    $region27: #{tpu_custom_call.1} parent=1 // pred_check_branch
      %114 = sbr.rel (0) target = $region29
    $region28: #{tpu_custom_call.1} parent=1 // pred_region
      %115 = dma.done [#allocation4], 256
    $region29: #{tpu_custom_call.1} parent=1 // pred_fallthru
      _
    // Predicated region
    $region30: #{tpu_custom_call.1} parent=1 // pred_check
      _
    $region31: #{tpu_custom_call.1} parent=1 // pred_check_branch
      %117 = sbr.rel (0) target = $region33
    $region32: #{tpu_custom_call.1} parent=1 // pred_region
      %118 = dma.done [#allocation9], 256
    $region33: #{tpu_custom_call.1} parent=1 // pred_fallthru
      _
    %119 = vsyncpa [#allocation3], 1
    %120 = vsyncpa [#allocation6], 1
    %121 = vsyncpa [#allocation4], 1
    %122 = vsyncpa [#allocation9], 1

</llo_original>
